<compile_context>
chip_gen: v7x
topology: tpu7x:2x2x1
jax: 0.10.0
libtpu: 0.0.40
codegen_flags: <defaults>
</compile_context>

<pallas_src>
import functools

import jax
import jax.numpy as jnp
from jax.experimental import pallas as pl
from jax.experimental.pallas import tpu as pltpu


KSIZE = 5   # conv kernel size along the sequence axis
PAD = 2     # padding along the sequence axis


def _round_up(v, m):
    return (v + m - 1) // m * m


def cnn_kernel(xcol_ref, w1_ref, b1_ref, w2_ref, b2_ref, out_ref, *, seq_len):
    """One block of whole batch elements per grid step.

    xcol_ref : (M, 5*F)      bf16  im2col of the input, M = MB * L (batch-major)
    w1_ref   : (5*F, C1P)    bf16  conv1 weights, taps stacked along K
    b1_ref   : (1, C1P)      f32
    w2_ref   : (5*C1P, C2P)  bf16  conv2 weights, taps stacked along K
    b2_ref   : (1, C2P)      f32
    out_ref  : (M, C2P)      f32   lane-dense output tile
    """
    m = xcol_ref.shape[0]
    c1p = w1_ref.shape[1]

    # ---- conv1: single im2col matmul on the MXU (K = 5*F), f32 accumulate ----
    h = jnp.dot(xcol_ref[...], w1_ref[...], preferred_element_type=jnp.float32)
    h = jnp.tanh(h + b1_ref[...])          # (M, C1P) f32; bias add + tanh in f32

    # ---- conv2: build the im2col LHS in registers from shifted copies of h ----
    # Rows are flattened batch-major / sequence-minor, so l = row % L; the mask
    # zeroes taps that fall outside a sequence (and therefore also prevents any
    # leakage across batch boundaries inside the block).
    l_idx = jax.lax.broadcasted_iota(jnp.int32, (m, 1), 0) % seq_len
    cols = []
    for k in range(KSIZE):
        off = k - PAD
        if off == 0:
            cols.append(h)
            continue
        if off > 0:
            shifted = jnp.concatenate(
                [h[off:, :], jnp.zeros((off, c1p), h.dtype)], axis=0)
        else:
            shifted = jnp.concatenate(
                [jnp.zeros((-off, c1p), h.dtype), h[:m + off, :]], axis=0)
        valid = jnp.logical_and(l_idx + off >= 0, l_idx + off < seq_len)
        cols.append(jnp.where(valid, shifted, 0.0))
    hcol = jnp.concatenate(cols, axis=1).astype(w2_ref.dtype)   # (M, 5*C1P)

    # ---- conv2: single im2col matmul (K = 5*C1P) + bias; lane-dense store ----
    y = jnp.dot(hcol, w2_ref[...], preferred_element_type=jnp.float32)
    out_ref[...] = (y + b2_ref[...]).astype(out_ref.dtype)


def cnn_forward(x, w1, b1, w2, b2, use_bf16=True):
    """x: (B, L, F) f32 -> (B, n_classes, L) f32 (matches PyTorch).

    Weights are stored as (tap, in, out), i.e. w[k, i, o] == w_pt[o, i, k, 0].
    """
    B, L, F = x.shape
    _, _, C1 = w1.shape
    _, _, C2 = w2.shape
    C1P = _round_up(C1, 128)        # 28  -> 128 (lane-dense hidden channels)
    C2P = _round_up(C2, 128)        # 4   -> 128 (lane-dense output store)

    # Choose how many whole batch elements go into one grid step (M = MB * L).
    TARGET_M = 256
    MB = max(1, min(B, -(-TARGET_M // L)))
    while MB < B and (MB * L) % 8 != 0:   # keep block sublane-aligned if tiled
        MB += 1
    n_steps = -(-B // MB)
    B_pad = n_steps * MB
    M_step = MB * L

    mm_dtype = jnp.bfloat16 if use_bf16 else jnp.float32

    # -- Glue: im2col of the input (seq zero-pad of 2 each side), batch folded --
    xp = jnp.pad(x, ((0, B_pad - B), (PAD, PAD), (0, 0)))          # (B_pad, L+4, F)
    xcol = jnp.concatenate([xp[:, k:k + L, :] for k in range(KSIZE)], axis=-1)
    xcol = xcol.reshape(B_pad * L, KSIZE * F).astype(mm_dtype)     # (B_pad*L, 5F)

    # -- Glue: pad channels to 128 lanes and stack taps along the K dimension --
    w1p = jnp.pad(w1, ((0, 0), (0, 0), (0, C1P - C1)))
    w1p = w1p.reshape(KSIZE * F, C1P).astype(mm_dtype)             # (5F, C1P)
    b1p = jnp.pad(b1, ((0, 0), (0, C1P - C1))).astype(jnp.float32)  # (1, C1P)
    w2p = jnp.pad(w2, ((0, 0), (0, C1P - C1), (0, C2P - C2)))
    w2p = w2p.reshape(KSIZE * C1P, C2P).astype(mm_dtype)           # (5*C1P, C2P)
    b2p = jnp.pad(b2, ((0, 0), (0, C2P - C2))).astype(jnp.float32)  # (1, C2P)

    kernel = functools.partial(cnn_kernel, seq_len=L)

    out_flat = pl.pallas_call(
        kernel,
        out_shape=jax.ShapeDtypeStruct((B_pad * L, C2P), jnp.float32),
        grid_spec=pltpu.PrefetchScalarGridSpec(
            num_scalar_prefetch=0,
            grid=(n_steps,),
            in_specs=[
                pl.BlockSpec((M_step, KSIZE * F), lambda i: (i, 0)),
                pl.BlockSpec((KSIZE * F, C1P), lambda i: (0, 0)),
                pl.BlockSpec((1, C1P), lambda i: (0, 0)),
                pl.BlockSpec((KSIZE * C1P, C2P), lambda i: (0, 0)),
                pl.BlockSpec((1, C2P), lambda i: (0, 0)),
            ],
            out_specs=pl.BlockSpec((M_step, C2P), lambda i: (i, 0)),
        ),
        compiler_params=pltpu.CompilerParams(
            dimension_semantics=("parallel",)),
    )(xcol, w1p, b1p, w2p, b2p)

    # Tiny post-processing on (B, L, C2) worth of data: drop channel padding and
    # produce the PyTorch layout (B, n_classes, L).
    out = out_flat.reshape(B_pad, L, C2P)[:B, :, :C2]
    return jnp.transpose(out, (0, 2, 1))


def cnn_reference(x, w1, b1, w2, b2):
    """Pure-JAX f32 reference with identical semantics (shifted matmuls)."""
    B, L, F = x.shape
    xp = jnp.pad(x, ((0, 0), (PAD, PAD), (0, 0)))
    h = sum(jnp.einsum("blf,fc->blc", xp[:, k:k + L, :], w1[k])
            for k in range(KSIZE)) + b1[0]
    h = jnp.tanh(h)
    hp = jnp.pad(h, ((0, 0), (PAD, PAD), (0, 0)))
    y = sum(jnp.einsum("blc,cn->bln", hp[:, k:k + L, :], w2[k])
            for k in range(KSIZE)) + b2[0]
    return jnp.transpose(y, (0, 2, 1))


if __name__ == "__main__":
    # Small shapes consistent with the module's forward: (B, L, F) input.
    B, L, F = 2, 16, 32
    n_classes = 4
    bottleneck = 28

    key = jax.random.PRNGKey(0)
    kx, kw1, kb1, kw2, kb2 = jax.random.split(key, 5)

    x = jax.random.normal(kx, (B, L, F), jnp.float32)
    # Deterministic synthetic params. PyTorch weights are (out, in, 5, 1);
    # here stored directly as (tap, in, out).
    w1 = jax.random.normal(kw1, (KSIZE, F, bottleneck), jnp.float32) * 0.05
    b1 = jax.random.normal(kb1, (1, bottleneck), jnp.float32) * 0.05
    w2 = jax.random.normal(kw2, (KSIZE, bottleneck, n_classes), jnp.float32) * 0.05
    b2 = jax.random.normal(kb2, (1, n_classes), jnp.float32) * 0.05

    out = jax.block_until_ready(cnn_forward(x, w1, b1, w2, b2))
    ref = cnn_reference(x, w1, b1, w2, b2)

    assert out.shape == (B, n_classes, L), out.shape
    # bf16 MXU operands with f32 accumulation: compare against the f32 reference
    # with a tolerance comfortably above bf16 rounding at these magnitudes.
    max_err = float(jnp.max(jnp.abs(out - ref)))
    assert jnp.allclose(out, ref, atol=3e-2, rtol=3e-2), f"mismatch vs reference ({max_err})"

    print("KERNEL_OK")
</pallas_src>

<mosaic_0001>
module attributes {stable_mosaic.version = 11 : i64} {
  func.func @cnn_kernel(%arg0: i32, %arg1: memref<32x160xbf16, #tpu.memory_space<vmem>>, %arg2: memref<160x128xbf16, #tpu.memory_space<vmem>>, %arg3: memref<1x128xf32, #tpu.memory_space<vmem>>, %arg4: memref<640x128xbf16, #tpu.memory_space<vmem>>, %arg5: memref<1x128xf32, #tpu.memory_space<vmem>>, %arg6: memref<32x128xf32, #tpu.memory_space<vmem>>) attributes {dimension_semantics = [#tpu.dimension_semantics<parallel>], iteration_bounds = array<i64: 1>, scalar_prefetch = 0 : i64, scratch_operands = 0 : i64, tpu.core_type = #tpu.core_type<tc>, window_params = [{transform_indices = @transform_0, window_bounds = array<i64: 32, 160>}, {pipeline_mode = #tpu.pipeline_mode<synchronous>, transform_indices = @transform_1, window_bounds = array<i64: 160, 128>}, {pipeline_mode = #tpu.pipeline_mode<synchronous>, transform_indices = @transform_2, window_bounds = array<i64: 1, 128>}, {pipeline_mode = #tpu.pipeline_mode<synchronous>, transform_indices = @transform_3, window_bounds = array<i64: 640, 128>}, {pipeline_mode = #tpu.pipeline_mode<synchronous>, transform_indices = @transform_4, window_bounds = array<i64: 1, 128>}, {transform_indices = @transform_5, window_bounds = array<i64: 32, 128>}]} {
    %c0 = arith.constant 0 : index
    %c0_0 = arith.constant 0 : index
    %0 = vector.load %arg1[%c0, %c0_0] : memref<32x160xbf16, #tpu.memory_space<vmem>>, vector<32x160xbf16>
    %c0_1 = arith.constant 0 : index
    %c0_2 = arith.constant 0 : index
    %1 = vector.load %arg2[%c0_1, %c0_2] : memref<160x128xbf16, #tpu.memory_space<vmem>>, vector<160x128xbf16>
    %cst = arith.constant dense<0.000000e+00> : vector<32x128xf32>
    %2 = tpu.matmul %0, %1, %cst {dimension_numbers = #tpu.dot_dimension_numbers<[1], [0], [0], [1], [0, 0, 1, 1], [], []>} : vector<32x160xbf16>, vector<160x128xbf16>, vector<32x128xf32> -> vector<32x128xf32>
    %c0_3 = arith.constant 0 : index
    %c0_4 = arith.constant 0 : index
    %3 = vector.load %arg3[%c0_3, %c0_4] : memref<1x128xf32, #tpu.memory_space<vmem>>, vector<1x128xf32>
    %4 = vector.broadcast %3 : vector<1x128xf32> to vector<32x128xf32>
    %5 = arith.addf %2, %4 : vector<32x128xf32>
    %6 = math.tanh %5 : vector<32x128xf32>
    %7 = tpu.iota {dimensions = array<i32: 0>} : vector<32x1xi32>
    %c16_i32 = arith.constant 16 : i32
    %c0_i32 = arith.constant 0 : i32
    %8 = arith.cmpi eq, %c16_i32, %c0_i32 : i32
    %c1_i32 = arith.constant 1 : i32
    %9 = arith.select %8, %c1_i32, %c16_i32 : i32
    %10 = vector.broadcast %9 : i32 to vector<32x1xi32>
    %11 = arith.remsi %7, %10 : vector<32x1xi32>
    %c0_i32_5 = arith.constant 0 : i32
    %12 = vector.broadcast %c0_i32_5 : i32 to vector<32x1xi32>
    %13 = arith.cmpi ne, %11, %12 : vector<32x1xi32>
    %c0_i32_6 = arith.constant 0 : i32
    %14 = vector.broadcast %c0_i32_6 : i32 to vector<32x1xi32>
    %15 = arith.cmpi slt, %11, %14 : vector<32x1xi32>
    %c0_i32_7 = arith.constant 0 : i32
    %16 = arith.cmpi slt, %9, %c0_i32_7 : i32
    %17 = vector.broadcast %16 : i1 to vector<32x1xi1>
    %18 = vector.broadcast %17 : vector<32x1xi1> to vector<32x1xi1>
    %19 = arith.xori %15, %18 : vector<32x1xi1>
    %20 = arith.andi %19, %13 : vector<32x1xi1>
    %21 = vector.broadcast %9 : i32 to vector<32x1xi32>
    %22 = arith.addi %11, %21 : vector<32x1xi32>
    %23 = arith.select %20, %22, %11 : vector<32x1xi1>, vector<32x1xi32>
    %cst_8 = arith.constant 0.000000e+00 : f32
    %24 = vector.broadcast %cst_8 : f32 to vector<2x128xf32>
    %25 = vector.extract_strided_slice %6 {offsets = [0, 0], sizes = [30, 128], strides = [1, 1]} : vector<32x128xf32> to vector<30x128xf32>
    %26 = tpu.concatenate %24, %25 in 0 : vector<2x128xf32>, vector<30x128xf32> -> vector<32x128xf32>
    %c-2_i32 = arith.constant -2 : i32
    %27 = vector.broadcast %c-2_i32 : i32 to vector<32x1xi32>
    %28 = arith.addi %23, %27 : vector<32x1xi32>
    %c0_i32_9 = arith.constant 0 : i32
    %29 = vector.broadcast %c0_i32_9 : i32 to vector<32x1xi32>
    %30 = arith.cmpi sge, %28, %29 : vector<32x1xi32>
    %c-2_i32_10 = arith.constant -2 : i32
    %31 = vector.broadcast %c-2_i32_10 : i32 to vector<32x1xi32>
    %32 = arith.addi %23, %31 : vector<32x1xi32>
    %c16_i32_11 = arith.constant 16 : i32
    %33 = vector.broadcast %c16_i32_11 : i32 to vector<32x1xi32>
    %34 = arith.cmpi slt, %32, %33 : vector<32x1xi32>
    %35 = arith.andi %30, %34 : vector<32x1xi1>
    %cst_12 = arith.constant 0.000000e+00 : f32
    %36 = vector.shape_cast %35 : vector<32x1xi1> to vector<32x1xi1>
    %37 = vector.broadcast %36 : vector<32x1xi1> to vector<32x128xi1>
    %38 = vector.broadcast %cst_12 : f32 to vector<32x128xf32>
    %39 = arith.select %37, %26, %38 : vector<32x128xi1>, vector<32x128xf32>
    %cst_13 = arith.constant 0.000000e+00 : f32
    %40 = vector.broadcast %cst_13 : f32 to vector<1x128xf32>
    %41 = vector.extract_strided_slice %6 {offsets = [0, 0], sizes = [31, 128], strides = [1, 1]} : vector<32x128xf32> to vector<31x128xf32>
    %42 = tpu.concatenate %40, %41 in 0 : vector<1x128xf32>, vector<31x128xf32> -> vector<32x128xf32>
    %c-1_i32 = arith.constant -1 : i32
    %43 = vector.broadcast %c-1_i32 : i32 to vector<32x1xi32>
    %44 = arith.addi %23, %43 : vector<32x1xi32>
    %c0_i32_14 = arith.constant 0 : i32
    %45 = vector.broadcast %c0_i32_14 : i32 to vector<32x1xi32>
    %46 = arith.cmpi sge, %44, %45 : vector<32x1xi32>
    %c-1_i32_15 = arith.constant -1 : i32
    %47 = vector.broadcast %c-1_i32_15 : i32 to vector<32x1xi32>
    %48 = arith.addi %23, %47 : vector<32x1xi32>
    %c16_i32_16 = arith.constant 16 : i32
    %49 = vector.broadcast %c16_i32_16 : i32 to vector<32x1xi32>
    %50 = arith.cmpi slt, %48, %49 : vector<32x1xi32>
    %51 = arith.andi %46, %50 : vector<32x1xi1>
    %cst_17 = arith.constant 0.000000e+00 : f32
    %52 = vector.shape_cast %51 : vector<32x1xi1> to vector<32x1xi1>
    %53 = vector.broadcast %52 : vector<32x1xi1> to vector<32x128xi1>
    %54 = vector.broadcast %cst_17 : f32 to vector<32x128xf32>
    %55 = arith.select %53, %42, %54 : vector<32x128xi1>, vector<32x128xf32>
    %56 = vector.extract_strided_slice %6 {offsets = [1, 0], sizes = [31, 128], strides = [1, 1]} : vector<32x128xf32> to vector<31x128xf32>
    %cst_18 = arith.constant 0.000000e+00 : f32
    %57 = vector.broadcast %cst_18 : f32 to vector<1x128xf32>
    %58 = tpu.concatenate %56, %57 in 0 : vector<31x128xf32>, vector<1x128xf32> -> vector<32x128xf32>
    %c1_i32_19 = arith.constant 1 : i32
    %59 = vector.broadcast %c1_i32_19 : i32 to vector<32x1xi32>
    %60 = arith.addi %23, %59 : vector<32x1xi32>
    %c0_i32_20 = arith.constant 0 : i32
    %61 = vector.broadcast %c0_i32_20 : i32 to vector<32x1xi32>
    %62 = arith.cmpi sge, %60, %61 : vector<32x1xi32>
    %c1_i32_21 = arith.constant 1 : i32
    %63 = vector.broadcast %c1_i32_21 : i32 to vector<32x1xi32>
    %64 = arith.addi %23, %63 : vector<32x1xi32>
    %c16_i32_22 = arith.constant 16 : i32
    %65 = vector.broadcast %c16_i32_22 : i32 to vector<32x1xi32>
    %66 = arith.cmpi slt, %64, %65 : vector<32x1xi32>
    %67 = arith.andi %62, %66 : vector<32x1xi1>
    %cst_23 = arith.constant 0.000000e+00 : f32
    %68 = vector.shape_cast %67 : vector<32x1xi1> to vector<32x1xi1>
    %69 = vector.broadcast %68 : vector<32x1xi1> to vector<32x128xi1>
    %70 = vector.broadcast %cst_23 : f32 to vector<32x128xf32>
    %71 = arith.select %69, %58, %70 : vector<32x128xi1>, vector<32x128xf32>
    %72 = vector.extract_strided_slice %6 {offsets = [2, 0], sizes = [30, 128], strides = [1, 1]} : vector<32x128xf32> to vector<30x128xf32>
    %cst_24 = arith.constant 0.000000e+00 : f32
    %73 = vector.broadcast %cst_24 : f32 to vector<2x128xf32>
    %74 = tpu.concatenate %72, %73 in 0 : vector<30x128xf32>, vector<2x128xf32> -> vector<32x128xf32>
    %c2_i32 = arith.constant 2 : i32
    %75 = vector.broadcast %c2_i32 : i32 to vector<32x1xi32>
    %76 = arith.addi %23, %75 : vector<32x1xi32>
    %c0_i32_25 = arith.constant 0 : i32
    %77 = vector.broadcast %c0_i32_25 : i32 to vector<32x1xi32>
    %78 = arith.cmpi sge, %76, %77 : vector<32x1xi32>
    %c2_i32_26 = arith.constant 2 : i32
    %79 = vector.broadcast %c2_i32_26 : i32 to vector<32x1xi32>
    %80 = arith.addi %23, %79 : vector<32x1xi32>
    %c16_i32_27 = arith.constant 16 : i32
    %81 = vector.broadcast %c16_i32_27 : i32 to vector<32x1xi32>
    %82 = arith.cmpi slt, %80, %81 : vector<32x1xi32>
    %83 = arith.andi %78, %82 : vector<32x1xi1>
    %cst_28 = arith.constant 0.000000e+00 : f32
    %84 = vector.shape_cast %83 : vector<32x1xi1> to vector<32x1xi1>
    %85 = vector.broadcast %84 : vector<32x1xi1> to vector<32x128xi1>
    %86 = vector.broadcast %cst_28 : f32 to vector<32x128xf32>
    %87 = arith.select %85, %74, %86 : vector<32x128xi1>, vector<32x128xf32>
    %88 = tpu.concatenate %39, %55, %6, %71, %87 in 1 : vector<32x128xf32>, vector<32x128xf32>, vector<32x128xf32>, vector<32x128xf32>, vector<32x128xf32> -> vector<32x640xf32>
    %89 = arith.truncf %88 : vector<32x640xf32> to vector<32x640xbf16>
    %c0_29 = arith.constant 0 : index
    %c0_30 = arith.constant 0 : index
    %90 = vector.load %arg4[%c0_29, %c0_30] : memref<640x128xbf16, #tpu.memory_space<vmem>>, vector<640x128xbf16>
    %cst_31 = arith.constant dense<0.000000e+00> : vector<32x128xf32>
    %91 = tpu.matmul %89, %90, %cst_31 {dimension_numbers = #tpu.dot_dimension_numbers<[1], [0], [0], [1], [0, 0, 1, 1], [], []>} : vector<32x640xbf16>, vector<640x128xbf16>, vector<32x128xf32> -> vector<32x128xf32>
    %c0_32 = arith.constant 0 : index
    %c0_33 = arith.constant 0 : index
    %92 = vector.load %arg5[%c0_32, %c0_33] : memref<1x128xf32, #tpu.memory_space<vmem>>, vector<1x128xf32>
    %93 = vector.broadcast %92 : vector<1x128xf32> to vector<32x128xf32>
    %94 = arith.addf %91, %93 : vector<32x128xf32>
    %c0_34 = arith.constant 0 : index
    %c0_35 = arith.constant 0 : index
    %95 = vector.load %arg6[%c0_34, %c0_35] : memref<32x128xf32, #tpu.memory_space<vmem>>, vector<32x128xf32>
    tpu.vector_store %arg6[%c0_34, %c0_35], %94 {strides = array<i32>} : memref<32x128xf32, #tpu.memory_space<vmem>>, vector<32x128xf32>,
    return
  }
  func.func @transform_0(%arg0: i32) -> (i32, i32) {
    %c0_i32 = arith.constant 0 : i32
    %c0_i32_0 = arith.constant 0 : i32
    return %arg0, %c0_i32 : i32, i32
  }
  func.func @transform_1(%arg0: i32) -> (i32, i32) {
    %c0_i32 = arith.constant 0 : i32
    %c0_i32_0 = arith.constant 0 : i32
    %c0_i32_1 = arith.constant 0 : i32
    return %c0_i32, %c0_i32_0 : i32, i32
  }
  func.func @transform_2(%arg0: i32) -> (i32, i32) {
    %c0_i32 = arith.constant 0 : i32
    %c0_i32_0 = arith.constant 0 : i32
    %c0_i32_1 = arith.constant 0 : i32
    return %c0_i32, %c0_i32_0 : i32, i32
  }
  func.func @transform_3(%arg0: i32) -> (i32, i32) {
    %c0_i32 = arith.constant 0 : i32
    %c0_i32_0 = arith.constant 0 : i32
    %c0_i32_1 = arith.constant 0 : i32
    return %c0_i32, %c0_i32_0 : i32, i32
  }
  func.func @transform_4(%arg0: i32) -> (i32, i32) {
    %c0_i32 = arith.constant 0 : i32
    %c0_i32_0 = arith.constant 0 : i32
    %c0_i32_1 = arith.constant 0 : i32
    return %c0_i32, %c0_i32_0 : i32, i32
  }
  func.func @transform_5(%arg0: i32) -> (i32, i32) {
    %c0_i32 = arith.constant 0 : i32
    %c0_i32_0 = arith.constant 0 : i32
    return %arg0, %c0_i32 : i32, i32
  }
}

</mosaic_0001>

<llo_original>
// kernel: tpu_custom_call.1
$region0: #{tpu_custom_call.1}
  #allocation0 [shape = 'u32[]', space=smem, size = 0x4, offset = 0x4, fixed_abs, tag = 'smem constant byte address 0x4 - core index']
  #allocation1 [shape = 'u32[144,128]{1,0:T(1,128)}', space=vmem, size = 0x12000, scoped, tag = 'internal scratch']
  %s0 = inlined_call_operand.hbm [shape: bf16[32,160], index: 0, kind: input, shape index: {}]
  %s1 = inlined_call_operand.hbm [shape: bf16[160,128], index: 1, kind: input, shape index: {}]
  %s2 = inlined_call_operand.vmem [shape: f32[1,128], index: 2, kind: input, shape index: {}]
  %s3 = inlined_call_operand.hbm [shape: bf16[640,128], index: 3, kind: input, shape index: {}]
  %s4 = inlined_call_operand.vmem [shape: f32[1,128], index: 4, kind: input, shape index: {}]
  %s5 = inlined_call_operand.hbm [shape: f32[32,128], index: 5, kind: output, shape index: {}]
  %s6 = sld [smem:[#allocation0]]
  $region42: #{tpu_custom_call.1} parent=0
    _
  %s8 = ssub.s32 1, %s6
  %s9 = scalar_select 0, %s8, %s6
  $region1: #{tpu_custom_call.1} parent=0
    #allocation2 [shape = 'u8[16384]{0}', space=vmem, size = 0x4000, scoped, tag = 'input window, operand 0, single buffered']
    #allocation3 [shape = 's32[1]{0}', space=sflag, size = 0x4, scoped, tag = 'scoped memory for tpu_custom_call.1']
    #allocation4 [shape = 's32[1]{0}', space=sflag, size = 0x4, scoped, tag = 'scoped memory for tpu_custom_call.1']
    #allocation5 [shape = 'u8[40960]{0}', space=vmem, size = 0xa000, scoped, tag = 'input window, operand 1, single buffered']
    #allocation6 [shape = 's32[1]{0}', space=sflag, size = 0x4, scoped, tag = 'scoped memory for tpu_custom_call.1']
    #allocation7 [shape = 'u8[163840]{0}', space=vmem, size = 0x28000, scoped, tag = 'input window, operand 3, single buffered']
    #allocation8 [shape = 'u8[16384]{0}', space=vmem, size = 0x4000, scoped, tag = 'output window, operand 0, single buffered']
    %10 = vsyncpa [#allocation3], 0
    %11 = vsyncpa [#allocation6], 0
    %12 = vsyncpa [#allocation4], 0
    // Predicated region
    $region2: #{tpu_custom_call.1} parent=1 // pred_check
      _
    $region3: #{tpu_custom_call.1} parent=1 // pred_check_branch
      %14 = sbr.rel (0) target = $region5
    $region4: #{tpu_custom_call.1} parent=1 // pred_region
      %s16 = ssub.s32 512, 512
      %17 = vsyncadd [#allocation3], %s16
      %s18 = sshll.u32 [#allocation2], 4
      %s19 = int_to_ptr.vmem [resolvable:$true] %s18
      %24 = dma.hbm_to_vmem [thread:$0]  %s0, 512, %s19, [#allocation3], 128, 128, 8
    $region5: #{tpu_custom_call.1} parent=1 // pred_fallthru
      _
    // Predicated region
    $region6: #{tpu_custom_call.1} parent=1 // pred_check
      _
    $region7: #{tpu_custom_call.1} parent=1 // pred_check_branch
      %26 = sbr.rel (0) target = $region9
    $region8: #{tpu_custom_call.1} parent=1 // pred_region
      %s28 = ssub.s32 1280, 1280
      %29 = vsyncadd [#allocation6], %s28
      %s30 = sshll.u32 [#allocation5], 4
      %s31 = int_to_ptr.vmem [resolvable:$true] %s30
      %36 = dma.hbm_to_vmem [thread:$0]  %s1, 1280, %s31, [#allocation6], 64, 64, 4
    $region9: #{tpu_custom_call.1} parent=1 // pred_fallthru
      _
    // Predicated region
    $region10: #{tpu_custom_call.1} parent=1 // pred_check
      _
    $region11: #{tpu_custom_call.1} parent=1 // pred_check_branch
      %38 = sbr.rel (0) target = $region13
    $region12: #{tpu_custom_call.1} parent=1 // pred_region
      _
    $region13: #{tpu_custom_call.1} parent=1 // pred_fallthru
      _
    // Predicated region
    $region14: #{tpu_custom_call.1} parent=1 // pred_check
      _
    $region15: #{tpu_custom_call.1} parent=1 // pred_check_branch
      %40 = sbr.rel (0) target = $region17
    $region16: #{tpu_custom_call.1} parent=1 // pred_region
      %s42 = ssub.s32 5120, 5120
      %43 = vsyncadd [#allocation6], %s42
      %s44 = sshll.u32 [#allocation7], 4
      %s45 = int_to_ptr.vmem [resolvable:$true] %s44
      %50 = dma.hbm_to_vmem [thread:$0]  %s3, 5120, %s45, [#allocation6], 64, 64, 4
    $region17: #{tpu_custom_call.1} parent=1 // pred_fallthru
      _
    // Predicated region
    $region18: #{tpu_custom_call.1} parent=1 // pred_check
      _
    $region19: #{tpu_custom_call.1} parent=1 // pred_check_branch
      %52 = sbr.rel (0) target = $region21
    $region20: #{tpu_custom_call.1} parent=1 // pred_region
      _
    $region21: #{tpu_custom_call.1} parent=1 // pred_fallthru
      _
    // Predicated region
    $region22: #{tpu_custom_call.1} parent=1 // pred_check
      _
    $region23: #{tpu_custom_call.1} parent=1 // pred_check_branch
      %54 = sbr.rel (0) target = $region25
    $region24: #{tpu_custom_call.1} parent=1 // pred_region
      %55 = dma.done [#allocation3], 512
    $region25: #{tpu_custom_call.1} parent=1 // pred_fallthru
      _
    // Predicated region
    $region26: #{tpu_custom_call.1} parent=1 // pred_check
      _
    $region27: #{tpu_custom_call.1} parent=1 // pred_check_branch
      %57 = sbr.rel (0) target = $region29
    $region28: #{tpu_custom_call.1} parent=1 // pred_region
      %58 = dma.done [#allocation6], 1280
    $region29: #{tpu_custom_call.1} parent=1 // pred_fallthru
      _
    // Predicated region
    $region30: #{tpu_custom_call.1} parent=1 // pred_check
      _
    $region31: #{tpu_custom_call.1} parent=1 // pred_check_branch
      %60 = sbr.rel (0) target = $region33
    $region32: #{tpu_custom_call.1} parent=1 // pred_region
      %61 = dma.done [#allocation6], 5120
    $region33: #{tpu_custom_call.1} parent=1 // pred_fallthru
      _
    %v63 = vld [vmem:[#allocation2] sm:$0xff]
    %v64 = vld [vmem:[#allocation2 + $0x8] sm:$0xff]
    %v65 = vld [vmem:[#allocation2 + $0x10] sm:$0xff]
    %v66 = vld [vmem:[#allocation2 + $0x18] sm:$0xff]
    %v67 = vld [vmem:[#allocation5] sm:$0xf]
    %v68 = vld [vmem:[#allocation5 + $0x4] sm:$0xf]
    %v69 = vld [vmem:[#allocation5 + $0x8] sm:$0xf]
    %v70 = vld [vmem:[#allocation5 + $0xc] sm:$0xf]
    %v71 = vld [vmem:[#allocation5 + $0x10] sm:$0xf]
    %v72 = vld [vmem:[#allocation5 + $0x14] sm:$0xf]
    %v73 = vld [vmem:[#allocation5 + $0x18] sm:$0xf]
    %v74 = vld [vmem:[#allocation5 + $0x1c] sm:$0xf]
    %v75 = vld [vmem:[#allocation5 + $0x20] sm:$0xf]
    %v76 = vld [vmem:[#allocation5 + $0x24] sm:$0xf]
    %v77 = vld [vmem:[#allocation5 + $0x28] sm:$0xf]
    %v78 = vld [vmem:[#allocation5 + $0x2c] sm:$0xf]
    %v79 = vld [vmem:[#allocation5 + $0x30] sm:$0xf]
    %v80 = vld [vmem:[#allocation5 + $0x34] sm:$0xf]
    %v81 = vld [vmem:[#allocation5 + $0x38] sm:$0xf]
    %v82 = vld [vmem:[#allocation5 + $0x3c] sm:$0xf]
    %v83 = vld [vmem:[#allocation5 + $0x40] sm:$0xf]
    %v84 = vld [vmem:[#allocation5 + $0x44] sm:$0xf]
    %v85 = vld [vmem:[#allocation5 + $0x48] sm:$0xf]
    %v86 = vld [vmem:[#allocation5 + $0x4c] sm:$0xf]
    %v87 = vld [vmem:[%s2] sm:$0x1]
    %v89 = vlaneseq
    %v90 = vshrl.u32 %v89, 7
    %v91 = vsub.s32 0, %v90
    %v92 = vrot.slane %v87, %v91
    %v98 = vunpack.c.l.b16 %v63
    %v99 = vunpack.c.h.b16 %v63
    %v100 = vunpack.c.l.b16 %v64
    %v101 = vunpack.c.h.b16 %v64
    %v102 = vunpack.c.l.b16 %v65
    %v103 = vunpack.c.h.b16 %v65
    %v104 = vunpack.c.l.b16 %v66
    %v105 = vunpack.c.h.b16 %v66
    %v106 = vpack.c.b16 %v100, %v98
    %v107 = vpack.c.b16 %v101, %v99
    %v108 = vpack.c.b16 %v104, %v102
    %v109 = vpack.c.b16 %v105, %v103
    %v132 = vunpack.c.l.b16 %v67
    %v133 = vunpack.c.l.b16 %v68
    %v134 = vunpack.c.l.b16 %v69
    %v135 = vunpack.c.l.b16 %v70
    %v136 = vunpack.c.l.b16 %v71
    %v137 = vunpack.c.l.b16 %v72
    %v138 = vunpack.c.l.b16 %v73
    %v139 = vunpack.c.l.b16 %v74
    %v140 = vunpack.c.l.b16 %v75
    %v141 = vunpack.c.l.b16 %v76
    %v142 = vunpack.c.l.b16 %v77
    %v143 = vunpack.c.l.b16 %v78
    %v144 = vunpack.c.l.b16 %v79
    %v145 = vunpack.c.l.b16 %v80
    %v146 = vunpack.c.l.b16 %v81
    %v147 = vunpack.c.l.b16 %v82
    %v148 = vunpack.c.l.b16 %v83
    %v149 = vunpack.c.l.b16 %v84
    %v150 = vunpack.c.l.b16 %v85
    %v151 = vunpack.c.l.b16 %v86
    %v152 = vpack.c.b16 %v133, %v132
    %v153 = vpack.c.b16 %v135, %v134
    %v154 = vpack.c.b16 %v137, %v136
    %v155 = vpack.c.b16 %v139, %v138
    %v156 = vpack.c.b16 %v141, %v140
    %v157 = vpack.c.b16 %v143, %v142
    %v158 = vpack.c.b16 %v145, %v144
    %v159 = vpack.c.b16 %v147, %v146
    %v160 = vpack.c.b16 %v149, %v148
    %v161 = vpack.c.b16 %v151, %v150
    %vm172 = vcmask 261120
    %v174 = vsel %vm172, %v107, 0
    %v177 = vsel %vm172, %v109, 0
    %179 = vmatprep.subr.bf16.mxu0 0
    %180 = vmatpush1.bf16.msra.mxu0 %v152
    %181 = vmatprep.subr.bf16.mxu0 0
    %182 = vmatpush1.bf16.msra.mxu0 %v153
    %183 = vmatprep.subr.bf16.mxu0 0
    %184 = vmatpush1.bf16.msra.mxu0 %v154
    %185 = vmatprep.subr.bf16.mxu0 0
    %186 = vmatpush1.bf16.msra.mxu0 %v155
    %187 = vmatprep.subr.bf16.mxu0 0
    %188 = vmatpush1.bf16.msra.mxu0 %v156
    %189 = vmatprep.subr.bf16.mxu0 0
    %190 = vmatpush1.bf16.msra.mxu0 %v157
    %191 = vmatprep.subr.bf16.mxu0 0
    %192 = vmatpush1.bf16.msra.mxu0 %v158
    %193 = vmatprep.subr.bf16.mxu0 0
    %194 = vmatpush1.bf16.msra.mxu0 %v159
    %195 = vmatprep.subr.bf16.mxu0 0
    %196 = vmatpush1.bf16.msra.mxu0 %v160
    %197 = vmatprep.subr.bf16.mxu0 0
    %198 = vmatpush1.bf16.msra.mxu0 %v161
    %199 = vmatprep.subr.bf16.mxu0 0
    %200 = vmatpush1.bf16.msra.mxu0 0
    %201 = vmatprep.subr.bf16.mxu0 0
    %202 = vmatpush1.bf16.msra.mxu0 0
    %203 = vmatprep.subr.bf16.mxu0 0
    %204 = vmatpush1.bf16.msra.mxu0 0
    %205 = vmatprep.subr.bf16.mxu0 0
    %206 = vmatpush1.bf16.msra.mxu0 0
    %207 = vmatprep.subr.bf16.mxu0 0
    %208 = vmatpush1.bf16.msra.mxu0 0
    %209 = vmatprep.subr.bf16.mxu0 0
    %210 = vmatpush1.bf16.msra.mxu0 0
    %211 = vmatprep.mubr.bf16.mxu0 %v174
    %212 = vmatmul.mubr.bf16.gmra.mrb[0].mxu0 %v106
    %v213 = vpop.f32.mrb[0].mxu0
    %v214 = vadd.f32 %v92, %v213
    %v215 = vpop.f32.mrb[0].mxu0
    %v216 = vpop.f32.mrb[0].mxu0
    %v217 = vadd.f32 %v92, %v216
    %v218 = vpop.f32.mrb[0].mxu0
    %219 = vmatprep.mubr.bf16.mxu0 %v177
    %220 = vmatmul.mubr.bf16.gmra.mrb[0].mxu0 %v108
    %v221 = vpop.f32.mrb[0].mxu0
    %v222 = vadd.f32 %v92, %v221
    %v223 = vpop.f32.mrb[0].mxu0
    %v224 = vpop.f32.mrb[0].mxu0
    %v225 = vadd.f32 %v92, %v224
    %v226 = vpop.f32.mrb[0].mxu0
    %227 = vdwg.mxu0
    %v228 = vtanh.pop %v214
    %v229 = vtanh.pop %v217
    %v230 = vtanh.pop %v222
    %v231 = vtanh.pop %v225
    %v232 = vlaneseq
    %v233 = vshrl.u32 %v232, 7
    %v234 = vadd.s32 %v233, 8
    %v235 = vadd.s32 %v233, 16
    %v236 = vadd.s32 %v233, 24
    %vm237 = vcmp.lt.s32.totalorder %v233, 0
    %v238 = vsub.s32 0, %v233
    %v239 = vsel %vm237, %v238, %v233
    %v240 = vshrl.u32 %v239, 4
    %v241 = vand.u32 %v239, 15
    %v242 = vsub.s32 0, %v241
    %v243 = vsel %vm237, %v242, %v241
    %vm244 = vcmp.lt.s32.totalorder %v234, 0
    %v245 = vsub.s32 0, %v234
    %v246 = vsel %vm244, %v245, %v234
    %v247 = vshrl.u32 %v246, 4
    %v248 = vand.u32 %v246, 15
    %v249 = vsub.s32 0, %v248
    %v250 = vsel %vm244, %v249, %v248
    %vm251 = vcmp.lt.s32.totalorder %v235, 0
    %v252 = vsub.s32 0, %v235
    %v253 = vsel %vm251, %v252, %v235
    %v254 = vshrl.u32 %v253, 4
    %v255 = vand.u32 %v253, 15
    %v256 = vsub.s32 0, %v255
    %v257 = vsel %vm251, %v256, %v255
    %vm258 = vcmp.lt.s32.totalorder %v236, 0
    %v259 = vsub.s32 0, %v236
    %v260 = vsel %vm258, %v259, %v236
    %v261 = vshrl.u32 %v260, 4
    %v262 = vand.u32 %v260, 15
    %v263 = vsub.s32 0, %v262
    %v264 = vsel %vm258, %v263, %v262
    %vm265 = vcmp.ne.s32.totalorder %v243, 0
    %vm266 = vcmp.ne.s32.totalorder %v250, 0
    %vm267 = vcmp.ne.s32.totalorder %v257, 0
    %vm268 = vcmp.ne.s32.totalorder %v264, 0
    %vm269 = vcmp.lt.s32.totalorder %v243, 0
    %vm270 = vcmp.lt.s32.totalorder %v250, 0
    %vm271 = vcmp.lt.s32.totalorder %v257, 0
    %vm272 = vcmp.lt.s32.totalorder %v264, 0
    %vm273 = vmand %vm269, %vm265
    %vm274 = vmand %vm270, %vm266
    %vm275 = vmand %vm271, %vm267
    %vm276 = vmand %vm272, %vm268
    %v277 = vadd.s32 %v243, 16
    %v278 = vadd.s32 %v250, 16
    %v279 = vadd.s32 %v257, 16
    %v280 = vadd.s32 %v264, 16
    %v281 = vsel %vm273, %v277, %v243
    %v282 = vsel %vm274, %v278, %v250
    %v283 = vsel %vm275, %v279, %v257
    %v284 = vsel %vm276, %v280, %v264
    %vm289 = vcmask 1041408
    %v290 = vrot.slane %v228, 6
    %v291 = vrot.slane %v229, 6
    %v292 = vsel %vm289, %v290, %v291
    %v293 = vrot.slane %v230, 6
    %v294 = vsel %vm289, %v291, %v293
    %v295 = vrot.slane %v231, 6
    %v296 = vsel %vm289, %v293, %v295
    %v301 = vsel %vm289, 0.0, %v290
    %v302 = vadd.s32 %v281, 4294967294
    %v303 = vadd.s32 %v282, 4294967294
    %v304 = vadd.s32 %v283, 4294967294
    %v305 = vadd.s32 %v284, 4294967294
    %vm306 = vcmp.ge.s32.totalorder %v302, 0
    %vm307 = vcmp.ge.s32.totalorder %v303, 0
    %vm308 = vcmp.ge.s32.totalorder %v304, 0
    %vm309 = vcmp.ge.s32.totalorder %v305, 0
    %vm310 = vcmp.lt.s32.totalorder %v302, 16
    %vm311 = vcmp.lt.s32.totalorder %v303, 16
    %vm312 = vcmp.lt.s32.totalorder %v304, 16
    %vm313 = vcmp.lt.s32.totalorder %v305, 16
    %vm314 = vmand %vm306, %vm310
    %vm315 = vmand %vm307, %vm311
    %vm316 = vmand %vm308, %vm312
    %vm317 = vmand %vm309, %vm313
    %v318 = vsel %vm314, 1, 0
    %v319 = vsel %vm315, 1, 0
    %v320 = vsel %vm316, 1, 0
    %v321 = vsel %vm317, 1, 0
    %vm322 = vcmp.eq.s32.totalorder %v318, 1
    %vm323 = vcmp.eq.s32.totalorder %v319, 1
    %vm324 = vcmp.eq.s32.totalorder %v320, 1
    %vm325 = vcmp.eq.s32.totalorder %v321, 1
    %v326 = vsel %vm322, %v301, 0.0
    %v327 = vsel %vm323, %v292, 0.0
    %v328 = vsel %vm324, %v294, 0.0
    %v329 = vsel %vm325, %v296, 0.0
    %vm330 = vcmask 1040384
    %v331 = vrot.slane %v228, 7
    %v332 = vrot.slane %v229, 7
    %v333 = vsel %vm330, %v331, %v332
    %v334 = vrot.slane %v230, 7
    %v335 = vsel %vm330, %v332, %v334
    %v336 = vrot.slane %v231, 7
    %v337 = vsel %vm330, %v334, %v336
    %v342 = vsel %vm330, 0.0, %v331
    %v343 = vadd.s32 %v281, 4294967295
    %v344 = vadd.s32 %v282, 4294967295
    %v345 = vadd.s32 %v283, 4294967295
    %v346 = vadd.s32 %v284, 4294967295
    %vm347 = vcmp.ge.s32.totalorder %v343, 0
    %vm348 = vcmp.ge.s32.totalorder %v344, 0
    %vm349 = vcmp.ge.s32.totalorder %v345, 0
    %vm350 = vcmp.ge.s32.totalorder %v346, 0
    %vm351 = vcmp.lt.s32.totalorder %v343, 16
    %vm352 = vcmp.lt.s32.totalorder %v344, 16
    %vm353 = vcmp.lt.s32.totalorder %v345, 16
    %vm354 = vcmp.lt.s32.totalorder %v346, 16
    %vm355 = vmand %vm347, %vm351
    %vm356 = vmand %vm348, %vm352
    %vm357 = vmand %vm349, %vm353
    %vm358 = vmand %vm350, %vm354
    %v359 = vsel %vm355, 1, 0
    %v360 = vsel %vm356, 1, 0
    %v361 = vsel %vm357, 1, 0
    %v362 = vsel %vm358, 1, 0
    %vm363 = vcmp.eq.s32.totalorder %v359, 1
    %vm364 = vcmp.eq.s32.totalorder %v360, 1
    %vm365 = vcmp.eq.s32.totalorder %v361, 1
    %vm366 = vcmp.eq.s32.totalorder %v362, 1
    %v367 = vsel %vm363, %v342, 0.0
    %v368 = vsel %vm364, %v333, 0.0
    %v369 = vsel %vm365, %v335, 0.0
    %v370 = vsel %vm366, %v337, 0.0
    %vm371 = vcmask 1046528
    %v372 = vrot.slane %v228, 1
    %v373 = vrot.slane %v229, 1
    %v374 = vsel %vm371, %v372, %v373
    %v375 = vrot.slane %v230, 1
    %v376 = vsel %vm371, %v373, %v375
    %v377 = vrot.slane %v231, 1
    %v378 = vsel %vm371, %v375, %v377
    %v383 = vsel %vm371, %v377, 0.0
    %v384 = vadd.s32 %v281, 1
    %v385 = vadd.s32 %v282, 1
    %v386 = vadd.s32 %v283, 1
    %v387 = vadd.s32 %v284, 1
    %vm388 = vcmp.ge.s32.totalorder %v384, 0
    %vm389 = vcmp.ge.s32.totalorder %v385, 0
    %vm390 = vcmp.ge.s32.totalorder %v386, 0
    %vm391 = vcmp.ge.s32.totalorder %v387, 0
    %vm392 = vcmp.lt.s32.totalorder %v384, 16
    %vm393 = vcmp.lt.s32.totalorder %v385, 16
    %vm394 = vcmp.lt.s32.totalorder %v386, 16
    %vm395 = vcmp.lt.s32.totalorder %v387, 16
    %vm396 = vmand %vm388, %vm392
    %vm397 = vmand %vm389, %vm393
    %vm398 = vmand %vm390, %vm394
    %vm399 = vmand %vm391, %vm395
    %v400 = vsel %vm396, 1, 0
    %v401 = vsel %vm397, 1, 0
    %v402 = vsel %vm398, 1, 0
    %v403 = vsel %vm399, 1, 0
    %vm404 = vcmp.eq.s32.totalorder %v400, 1
    %vm405 = vcmp.eq.s32.totalorder %v401, 1
    %vm406 = vcmp.eq.s32.totalorder %v402, 1
    %vm407 = vcmp.eq.s32.totalorder %v403, 1
    %v408 = vsel %vm404, %v374, 0.0
    %v409 = vsel %vm405, %v376, 0.0
    %v410 = vsel %vm406, %v378, 0.0
    %v411 = vsel %vm407, %v383, 0.0
    %vm412 = vcmask 1045504
    %v413 = vrot.slane %v228, 2
    %v414 = vrot.slane %v229, 2
    %v415 = vsel %vm412, %v413, %v414
    %v416 = vrot.slane %v230, 2
    %v417 = vsel %vm412, %v414, %v416
    %v418 = vrot.slane %v231, 2
    %v419 = vsel %vm412, %v416, %v418
    %v424 = vsel %vm412, %v418, 0.0
    %v425 = vadd.s32 %v281, 2
    %v426 = vadd.s32 %v282, 2
    %v427 = vadd.s32 %v283, 2
    %v428 = vadd.s32 %v284, 2
    %vm429 = vcmp.ge.s32.totalorder %v425, 0
    %vm430 = vcmp.ge.s32.totalorder %v426, 0
    %vm431 = vcmp.ge.s32.totalorder %v427, 0
    %vm432 = vcmp.ge.s32.totalorder %v428, 0
    %vm433 = vcmp.lt.s32.totalorder %v425, 16
    %vm434 = vcmp.lt.s32.totalorder %v426, 16
    %vm435 = vcmp.lt.s32.totalorder %v427, 16
    %vm436 = vcmp.lt.s32.totalorder %v428, 16
    %vm437 = vmand %vm429, %vm433
    %vm438 = vmand %vm430, %vm434
    %vm439 = vmand %vm431, %vm435
    %vm440 = vmand %vm432, %vm436
    %v441 = vsel %vm437, 1, 0
    %v442 = vsel %vm438, 1, 0
    %v443 = vsel %vm439, 1, 0
    %v444 = vsel %vm440, 1, 0
    %vm445 = vcmp.eq.s32.totalorder %v441, 1
    %vm446 = vcmp.eq.s32.totalorder %v442, 1
    %vm447 = vcmp.eq.s32.totalorder %v443, 1
    %vm448 = vcmp.eq.s32.totalorder %v444, 1
    %v449 = vsel %vm445, %v415, 0.0
    %v450 = vsel %vm446, %v417, 0.0
    %v451 = vsel %vm447, %v419, 0.0
    %v452 = vsel %vm448, %v424, 0.0
    %v453 = vpack.c.bf16 %v327, %v326
    %v454 = vpack.c.bf16 %v368, %v367
    %v455 = vpack.c.bf16 %v229, %v228
    %v456 = vpack.c.bf16 %v409, %v408
    %v457 = vpack.c.bf16 %v450, %v449
    %v458 = vpack.c.bf16 %v329, %v328
    %v459 = vpack.c.bf16 %v370, %v369
    %v460 = vpack.c.bf16 %v231, %v230
    %v461 = vpack.c.bf16 %v411, %v410
    %v462 = vpack.c.bf16 %v452, %v451
    %v463 = vld [vmem:[#allocation7] sm:$0xf]
    %v464 = vld [vmem:[#allocation7 + $0x4] sm:$0xf]
    %v465 = vld [vmem:[#allocation7 + $0x8] sm:$0xf]
    %v466 = vld [vmem:[#allocation7 + $0xc] sm:$0xf]
    %v467 = vld [vmem:[#allocation7 + $0x10] sm:$0xf]
    %v468 = vld [vmem:[#allocation7 + $0x14] sm:$0xf]
    %v469 = vld [vmem:[#allocation7 + $0x18] sm:$0xf]
    %v470 = vld [vmem:[#allocation7 + $0x1c] sm:$0xf]
    %v471 = vld [vmem:[#allocation7 + $0x20] sm:$0xf]
    %v472 = vld [vmem:[#allocation7 + $0x24] sm:$0xf]
    %v473 = vld [vmem:[#allocation7 + $0x28] sm:$0xf]
    %v474 = vld [vmem:[#allocation7 + $0x2c] sm:$0xf]
    %v475 = vld [vmem:[#allocation7 + $0x30] sm:$0xf]
    %v476 = vld [vmem:[#allocation7 + $0x34] sm:$0xf]
    %v477 = vld [vmem:[#allocation7 + $0x38] sm:$0xf]
    %v478 = vld [vmem:[#allocation7 + $0x3c] sm:$0xf]
    %v479 = vld [vmem:[#allocation7 + $0x40] sm:$0xf]
    %v480 = vld [vmem:[#allocation7 + $0x44] sm:$0xf]
    %v481 = vld [vmem:[#allocation7 + $0x48] sm:$0xf]
    %v482 = vld [vmem:[#allocation7 + $0x4c] sm:$0xf]
    %v483 = vld [vmem:[#allocation7 + $0x50] sm:$0xf]
    %v484 = vld [vmem:[#allocation7 + $0x54] sm:$0xf]
    %v485 = vld [vmem:[#allocation7 + $0x58] sm:$0xf]
    %v486 = vld [vmem:[#allocation7 + $0x5c] sm:$0xf]
    %v487 = vld [vmem:[#allocation7 + $0x60] sm:$0xf]
    %v488 = vld [vmem:[#allocation7 + $0x64] sm:$0xf]
    %v489 = vld [vmem:[#allocation7 + $0x68] sm:$0xf]
    %v490 = vld [vmem:[#allocation7 + $0x6c] sm:$0xf]
    %v491 = vld [vmem:[#allocation7 + $0x70] sm:$0xf]
    %v492 = vld [vmem:[#allocation7 + $0x74] sm:$0xf]
    %v493 = vld [vmem:[#allocation7 + $0x78] sm:$0xf]
    %v494 = vld [vmem:[#allocation7 + $0x7c] sm:$0xf]
    %v495 = vld [vmem:[#allocation7 + $0x80] sm:$0xf]
    %v496 = vld [vmem:[#allocation7 + $0x84] sm:$0xf]
    %v497 = vld [vmem:[#allocation7 + $0x88] sm:$0xf]
    %v498 = vld [vmem:[#allocation7 + $0x8c] sm:$0xf]
    %v499 = vld [vmem:[#allocation7 + $0x90] sm:$0xf]
    %v500 = vld [vmem:[#allocation7 + $0x94] sm:$0xf]
    %v501 = vld [vmem:[#allocation7 + $0x98] sm:$0xf]
    %v502 = vld [vmem:[#allocation7 + $0x9c] sm:$0xf]
    %v503 = vld [vmem:[#allocation7 + $0xa0] sm:$0xf]
    %v504 = vld [vmem:[#allocation7 + $0xa4] sm:$0xf]
    %v505 = vld [vmem:[#allocation7 + $0xa8] sm:$0xf]
    %v506 = vld [vmem:[#allocation7 + $0xac] sm:$0xf]
    %v507 = vld [vmem:[#allocation7 + $0xb0] sm:$0xf]
    %v508 = vld [vmem:[#allocation7 + $0xb4] sm:$0xf]
    %v509 = vld [vmem:[#allocation7 + $0xb8] sm:$0xf]
    %v510 = vld [vmem:[#allocation7 + $0xbc] sm:$0xf]
    %v511 = vld [vmem:[#allocation7 + $0xc0] sm:$0xf]
    %v512 = vld [vmem:[#allocation7 + $0xc4] sm:$0xf]
    %v513 = vld [vmem:[#allocation7 + $0xc8] sm:$0xf]
    %v514 = vld [vmem:[#allocation7 + $0xcc] sm:$0xf]
    %v515 = vld [vmem:[#allocation7 + $0xd0] sm:$0xf]
    %v516 = vld [vmem:[#allocation7 + $0xd4] sm:$0xf]
    %v517 = vld [vmem:[#allocation7 + $0xd8] sm:$0xf]
    %v518 = vld [vmem:[#allocation7 + $0xdc] sm:$0xf]
    %v519 = vld [vmem:[#allocation7 + $0xe0] sm:$0xf]
    %v520 = vld [vmem:[#allocation7 + $0xe4] sm:$0xf]
    %v521 = vld [vmem:[#allocation7 + $0xe8] sm:$0xf]
    %v522 = vld [vmem:[#allocation7 + $0xec] sm:$0xf]
    %v523 = vld [vmem:[#allocation7 + $0xf0] sm:$0xf]
    %v524 = vld [vmem:[#allocation7 + $0xf4] sm:$0xf]
    %v525 = vld [vmem:[#allocation7 + $0xf8] sm:$0xf]
    %v526 = vld [vmem:[#allocation7 + $0xfc] sm:$0xf]
    %v527 = vld [vmem:[#allocation7 + $0x100] sm:$0xf]
    %v528 = vld [vmem:[#allocation7 + $0x104] sm:$0xf]
    %v529 = vld [vmem:[#allocation7 + $0x108] sm:$0xf]
    %v530 = vld [vmem:[#allocation7 + $0x10c] sm:$0xf]
    %v531 = vld [vmem:[#allocation7 + $0x110] sm:$0xf]
    %v532 = vld [vmem:[#allocation7 + $0x114] sm:$0xf]
    %v533 = vld [vmem:[#allocation7 + $0x118] sm:$0xf]
    %v534 = vld [vmem:[#allocation7 + $0x11c] sm:$0xf]
    %v535 = vld [vmem:[#allocation7 + $0x120] sm:$0xf]
    %v536 = vld [vmem:[#allocation7 + $0x124] sm:$0xf]
    %v537 = vld [vmem:[#allocation7 + $0x128] sm:$0xf]
    %v538 = vld [vmem:[#allocation7 + $0x12c] sm:$0xf]
    %v539 = vld [vmem:[#allocation7 + $0x130] sm:$0xf]
    %v540 = vld [vmem:[#allocation7 + $0x134] sm:$0xf]
    %v541 = vld [vmem:[#allocation7 + $0x138] sm:$0xf]
    %v542 = vld [vmem:[#allocation7 + $0x13c] sm:$0xf]
    %v543 = vld [vmem:[%s4] sm:$0x1]
    %v545 = vlaneseq
    %v546 = vshrl.u32 %v545, 7
    %v547 = vsub.s32 0, %v546
    %v548 = vrot.slane %v543, %v547
    %v630 = vunpack.c.l.b16 %v463
    %v631 = vunpack.c.l.b16 %v464
    %v632 = vunpack.c.l.b16 %v465
    %v633 = vunpack.c.l.b16 %v466
    %v634 = vunpack.c.l.b16 %v467
    %v635 = vunpack.c.l.b16 %v468
    %v636 = vunpack.c.l.b16 %v469
    %v637 = vunpack.c.l.b16 %v470
    %v638 = vunpack.c.l.b16 %v471
    %v639 = vunpack.c.l.b16 %v472
    %v640 = vunpack.c.l.b16 %v473
    %v641 = vunpack.c.l.b16 %v474
    %v642 = vunpack.c.l.b16 %v475
    %v643 = vunpack.c.l.b16 %v476
    %v644 = vunpack.c.l.b16 %v477
    %v645 = vunpack.c.l.b16 %v478
    %v646 = vunpack.c.l.b16 %v479
    %v647 = vunpack.c.l.b16 %v480
    %v648 = vunpack.c.l.b16 %v481
    %v649 = vunpack.c.l.b16 %v482
    %v650 = vunpack.c.l.b16 %v483
    %v651 = vunpack.c.l.b16 %v484
    %v652 = vunpack.c.l.b16 %v485
    %v653 = vunpack.c.l.b16 %v486
    %v654 = vunpack.c.l.b16 %v487
    %v655 = vunpack.c.l.b16 %v488
    %v656 = vunpack.c.l.b16 %v489
    %v657 = vunpack.c.l.b16 %v490
    %v658 = vunpack.c.l.b16 %v491
    %v659 = vunpack.c.l.b16 %v492
    %v660 = vunpack.c.l.b16 %v493
    %v661 = vunpack.c.l.b16 %v494
    %v662 = vunpack.c.l.b16 %v495
    %v663 = vunpack.c.l.b16 %v496
    %v664 = vunpack.c.l.b16 %v497
    %v665 = vunpack.c.l.b16 %v498
    %v666 = vunpack.c.l.b16 %v499
    %v667 = vunpack.c.l.b16 %v500
    %v668 = vunpack.c.l.b16 %v501
    %v669 = vunpack.c.l.b16 %v502
    %v670 = vunpack.c.l.b16 %v503
    %v671 = vunpack.c.l.b16 %v504
    %v672 = vunpack.c.l.b16 %v505
    %v673 = vunpack.c.l.b16 %v506
    %v674 = vunpack.c.l.b16 %v507
    %v675 = vunpack.c.l.b16 %v508
    %v676 = vunpack.c.l.b16 %v509
    %v677 = vunpack.c.l.b16 %v510
    %v678 = vunpack.c.l.b16 %v511
    %v679 = vunpack.c.l.b16 %v512
    %v680 = vunpack.c.l.b16 %v513
    %v681 = vunpack.c.l.b16 %v514
    %v682 = vunpack.c.l.b16 %v515
    %v683 = vunpack.c.l.b16 %v516
    %v684 = vunpack.c.l.b16 %v517
    %v685 = vunpack.c.l.b16 %v518
    %v686 = vunpack.c.l.b16 %v519
    %v687 = vunpack.c.l.b16 %v520
    %v688 = vunpack.c.l.b16 %v521
    %v689 = vunpack.c.l.b16 %v522
    %v690 = vunpack.c.l.b16 %v523
    %v691 = vunpack.c.l.b16 %v524
    %v692 = vunpack.c.l.b16 %v525
    %v693 = vunpack.c.l.b16 %v526
    %v694 = vunpack.c.l.b16 %v527
    %v695 = vunpack.c.l.b16 %v528
    %v696 = vunpack.c.l.b16 %v529
    %v697 = vunpack.c.l.b16 %v530
    %v698 = vunpack.c.l.b16 %v531
    %v699 = vunpack.c.l.b16 %v532
    %v700 = vunpack.c.l.b16 %v533
    %v701 = vunpack.c.l.b16 %v534
    %v702 = vunpack.c.l.b16 %v535
    %v703 = vunpack.c.l.b16 %v536
    %v704 = vunpack.c.l.b16 %v537
    %v705 = vunpack.c.l.b16 %v538
    %v706 = vunpack.c.l.b16 %v539
    %v707 = vunpack.c.l.b16 %v540
    %v708 = vunpack.c.l.b16 %v541
    %v709 = vunpack.c.l.b16 %v542
    %v710 = vpack.c.b16 %v631, %v630
    %v711 = vpack.c.b16 %v633, %v632
    %v712 = vpack.c.b16 %v635, %v634
    %v713 = vpack.c.b16 %v637, %v636
    %v714 = vpack.c.b16 %v639, %v638
    %v715 = vpack.c.b16 %v641, %v640
    %v716 = vpack.c.b16 %v643, %v642
    %v717 = vpack.c.b16 %v645, %v644
    %v718 = vpack.c.b16 %v647, %v646
    %v719 = vpack.c.b16 %v649, %v648
    %v720 = vpack.c.b16 %v651, %v650
    %v721 = vpack.c.b16 %v653, %v652
    %v722 = vpack.c.b16 %v655, %v654
    %v723 = vpack.c.b16 %v657, %v656
    %v724 = vpack.c.b16 %v659, %v658
    %v725 = vpack.c.b16 %v661, %v660
    %v726 = vpack.c.b16 %v663, %v662
    %v727 = vpack.c.b16 %v665, %v664
    %v728 = vpack.c.b16 %v667, %v666
    %v729 = vpack.c.b16 %v669, %v668
    %v730 = vpack.c.b16 %v671, %v670
    %v731 = vpack.c.b16 %v673, %v672
    %v732 = vpack.c.b16 %v675, %v674
    %v733 = vpack.c.b16 %v677, %v676
    %v734 = vpack.c.b16 %v679, %v678
    %v735 = vpack.c.b16 %v681, %v680
    %v736 = vpack.c.b16 %v683, %v682
    %v737 = vpack.c.b16 %v685, %v684
    %v738 = vpack.c.b16 %v687, %v686
    %v739 = vpack.c.b16 %v689, %v688
    %v740 = vpack.c.b16 %v691, %v690
    %v741 = vpack.c.b16 %v693, %v692
    %v742 = vpack.c.b16 %v695, %v694
    %v743 = vpack.c.b16 %v697, %v696
    %v744 = vpack.c.b16 %v699, %v698
    %v745 = vpack.c.b16 %v701, %v700
    %v746 = vpack.c.b16 %v703, %v702
    %v747 = vpack.c.b16 %v705, %v704
    %v748 = vpack.c.b16 %v707, %v706
    %v749 = vpack.c.b16 %v709, %v708
    %790 = vmatprep.subr.bf16.mxu0 0
    %791 = vmatpush1.bf16.msra.mxu0 %v710
    %792 = vmatprep.subr.bf16.mxu0 0
    %793 = vmatpush1.bf16.msra.mxu0 %v711
    %794 = vmatprep.subr.bf16.mxu0 0
    %795 = vmatpush1.bf16.msra.mxu0 %v712
    %796 = vmatprep.subr.bf16.mxu0 0
    %797 = vmatpush1.bf16.msra.mxu0 %v713
    %798 = vmatprep.subr.bf16.mxu0 0
    %799 = vmatpush1.bf16.msra.mxu0 %v714
    %800 = vmatprep.subr.bf16.mxu0 0
    %801 = vmatpush1.bf16.msra.mxu0 %v715
    %802 = vmatprep.subr.bf16.mxu0 0
    %803 = vmatpush1.bf16.msra.mxu0 %v716
    %804 = vmatprep.subr.bf16.mxu0 0
    %805 = vmatpush1.bf16.msra.mxu0 %v717
    %806 = vmatprep.subr.bf16.mxu0 0
    %807 = vmatpush1.bf16.msra.mxu0 %v718
    %808 = vmatprep.subr.bf16.mxu0 0
    %809 = vmatpush1.bf16.msra.mxu0 %v719
    %810 = vmatprep.subr.bf16.mxu0 0
    %811 = vmatpush1.bf16.msra.mxu0 %v720
    %812 = vmatprep.subr.bf16.mxu0 0
    %813 = vmatpush1.bf16.msra.mxu0 %v721
    %814 = vmatprep.subr.bf16.mxu0 0
    %815 = vmatpush1.bf16.msra.mxu0 %v722
    %816 = vmatprep.subr.bf16.mxu0 0
    %817 = vmatpush1.bf16.msra.mxu0 %v723
    %818 = vmatprep.subr.bf16.mxu0 0
    %819 = vmatpush1.bf16.msra.mxu0 %v724
    %820 = vmatprep.subr.bf16.mxu0 0
    %821 = vmatpush1.bf16.msra.mxu0 %v725
    %822 = vmatprep.mubr.bf16.mxu0 %v454
    %823 = vmatmul.mubr.bf16.gmra.mrb[0].mxu0 %v453
    %v824 = vpop.f32.mrb[0].mxu0
    %v825 = vadd.f32 %v548, %v824
    %v826 = vpop.f32.mrb[0].mxu0
    %v827 = vpop.f32.mrb[0].mxu0
    %v828 = vadd.f32 %v548, %v827
    %v829 = vpop.f32.mrb[0].mxu0
    %830 = vmatprep.mubr.bf16.mxu0 %v459
    %831 = vmatmul.mubr.bf16.gmra.mrb[0].mxu0 %v458
    %v832 = vpop.f32.mrb[0].mxu0
    %v833 = vadd.f32 %v548, %v832
    %v834 = vpop.f32.mrb[0].mxu0
    %v835 = vpop.f32.mrb[0].mxu0
    %v836 = vadd.f32 %v548, %v835
    %v837 = vpop.f32.mrb[0].mxu0
    %838 = vdwg.mxu0
    %839 = vmatprep.subr.bf16.mxu0 0
    %840 = vmatpush1.bf16.msra.mxu0 %v726
    %841 = vmatprep.subr.bf16.mxu0 0
    %842 = vmatpush1.bf16.msra.mxu0 %v727
    %843 = vmatprep.subr.bf16.mxu0 0
    %844 = vmatpush1.bf16.msra.mxu0 %v728
    %845 = vmatprep.subr.bf16.mxu0 0
    %846 = vmatpush1.bf16.msra.mxu0 %v729
    %847 = vmatprep.subr.bf16.mxu0 0
    %848 = vmatpush1.bf16.msra.mxu0 %v730
    %849 = vmatprep.subr.bf16.mxu0 0
    %850 = vmatpush1.bf16.msra.mxu0 %v731
    %851 = vmatprep.subr.bf16.mxu0 0
    %852 = vmatpush1.bf16.msra.mxu0 %v732
    %853 = vmatprep.subr.bf16.mxu0 0
    %854 = vmatpush1.bf16.msra.mxu0 %v733
    %855 = vmatprep.subr.bf16.mxu0 0
    %856 = vmatpush1.bf16.msra.mxu0 %v734
    %857 = vmatprep.subr.bf16.mxu0 0
    %858 = vmatpush1.bf16.msra.mxu0 %v735
    %859 = vmatprep.subr.bf16.mxu0 0
    %860 = vmatpush1.bf16.msra.mxu0 %v736
    %861 = vmatprep.subr.bf16.mxu0 0
    %862 = vmatpush1.bf16.msra.mxu0 %v737
    %863 = vmatprep.subr.bf16.mxu0 0
    %864 = vmatpush1.bf16.msra.mxu0 %v738
    %865 = vmatprep.subr.bf16.mxu0 0
    %866 = vmatpush1.bf16.msra.mxu0 %v739
    %867 = vmatprep.subr.bf16.mxu0 0
    %868 = vmatpush1.bf16.msra.mxu0 %v740
    %869 = vmatprep.subr.bf16.mxu0 0
    %870 = vmatpush1.bf16.msra.mxu0 %v741
    %871 = vmatprep.mubr.bf16.mxu0 %v456
    %872 = vmatmul.mubr.bf16.gmra.mrb[0].mxu0 %v455
    %v873 = vpop.f32.mrb[0].mxu0
    %v874 = vadd.f32 %v825, %v873
    %v875 = vpop.f32.mrb[0].mxu0
    %v876 = vpop.f32.mrb[0].mxu0
    %v877 = vadd.f32 %v828, %v876
    %v878 = vpop.f32.mrb[0].mxu0
    %879 = vmatprep.mubr.bf16.mxu0 %v461
    %880 = vmatmul.mubr.bf16.gmra.mrb[0].mxu0 %v460
    %v881 = vpop.f32.mrb[0].mxu0
    %v882 = vadd.f32 %v833, %v881
    %v883 = vpop.f32.mrb[0].mxu0
    %v884 = vpop.f32.mrb[0].mxu0
    %v885 = vadd.f32 %v836, %v884
    %v886 = vpop.f32.mrb[0].mxu0
    %887 = vdwg.mxu0
    %888 = vmatprep.subr.bf16.mxu0 0
    %889 = vmatpush1.bf16.msra.mxu0 %v742
    %890 = vmatprep.subr.bf16.mxu0 0
    %891 = vmatpush1.bf16.msra.mxu0 %v743
    %892 = vmatprep.subr.bf16.mxu0 0
    %893 = vmatpush1.bf16.msra.mxu0 %v744
    %894 = vmatprep.subr.bf16.mxu0 0
    %895 = vmatpush1.bf16.msra.mxu0 %v745
    %896 = vmatprep.subr.bf16.mxu0 0
    %897 = vmatpush1.bf16.msra.mxu0 %v746
    %898 = vmatprep.subr.bf16.mxu0 0
    %899 = vmatpush1.bf16.msra.mxu0 %v747
    %900 = vmatprep.subr.bf16.mxu0 0
    %901 = vmatpush1.bf16.msra.mxu0 %v748
    %902 = vmatprep.subr.bf16.mxu0 0
    %903 = vmatpush1.bf16.msra.mxu0 %v749
    %904 = vmatprep.subr.bf16.mxu0 0
    %905 = vmatpush1.bf16.msra.mxu0 0
    %906 = vmatprep.subr.bf16.mxu0 0
    %907 = vmatpush1.bf16.msra.mxu0 0
    %908 = vmatprep.subr.bf16.mxu0 0
    %909 = vmatpush1.bf16.msra.mxu0 0
    %910 = vmatprep.subr.bf16.mxu0 0
    %911 = vmatpush1.bf16.msra.mxu0 0
    %912 = vmatprep.subr.bf16.mxu0 0
    %913 = vmatpush1.bf16.msra.mxu0 0
    %914 = vmatprep.subr.bf16.mxu0 0
    %915 = vmatpush1.bf16.msra.mxu0 0
    %916 = vmatprep.subr.bf16.mxu0 0
    %917 = vmatpush1.bf16.msra.mxu0 0
    %918 = vmatprep.subr.bf16.mxu0 0
    %919 = vmatpush1.bf16.msra.mxu0 0
    %920 = vmatprep.mubr.bf16.mxu0 0
    %921 = vmatmul.mubr.bf16.gmra.mrb[0].mxu0 %v457
    %v922 = vpop.f32.mrb[0].mxu0
    %v923 = vadd.f32 %v874, %v922
    %v924 = vpop.f32.mrb[0].mxu0
    %v925 = vpop.f32.mrb[0].mxu0
    %v926 = vadd.f32 %v877, %v925
    %v927 = vpop.f32.mrb[0].mxu0
    %928 = vmatprep.mubr.bf16.mxu0 0
    %929 = vmatmul.mubr.bf16.gmra.mrb[0].mxu0 %v462
    %v930 = vpop.f32.mrb[0].mxu0
    %v931 = vadd.f32 %v882, %v930
    %v932 = vpop.f32.mrb[0].mxu0
    %v933 = vpop.f32.mrb[0].mxu0
    %v934 = vadd.f32 %v885, %v933
    %v935 = vpop.f32.mrb[0].mxu0
    %936 = vdwg.mxu0
    %937 = vst [vmem:[#allocation8] sm:$0xff] %v923
    %938 = vst [vmem:[#allocation8 + $0x8] sm:$0xff] %v926
    %939 = vst [vmem:[#allocation8 + $0x10] sm:$0xff] %v931
    %940 = vst [vmem:[#allocation8 + $0x18] sm:$0xff] %v934
    // Predicated region
    $region34: #{tpu_custom_call.1} parent=1 // pred_check
      _
    $region35: #{tpu_custom_call.1} parent=1 // pred_check_branch
      %942 = sbr.rel (0) target = $region37
    $region36: #{tpu_custom_call.1} parent=1 // pred_region
      %s944 = ssub.s32 512, 512
      %945 = vsyncadd [#allocation4], %s944
      %s946 = sshll.u32 [#allocation8], 4
      %s947 = int_to_ptr.vmem [resolvable:$true] %s946
      %952 = dma.vmem_to_hbm [thread:$0]  %s947, 512, %s5, [#allocation4], 128, 128, 8
    $region37: #{tpu_custom_call.1} parent=1 // pred_fallthru
      _
    // Predicated region
    $region38: #{tpu_custom_call.1} parent=1 // pred_check
      _
    $region39: #{tpu_custom_call.1} parent=1 // pred_check_branch
      %954 = sbr.rel (0) target = $region41
    $region40: #{tpu_custom_call.1} parent=1 // pred_region
      %955 = dma.done [#allocation4], 512
    $region41: #{tpu_custom_call.1} parent=1 // pred_fallthru
      _
    %956 = vsyncpa [#allocation3], 1
    %957 = vsyncpa [#allocation6], 1
    %958 = vsyncpa [#allocation4], 1

</llo_original>
